<compile_context>
chip_gen: v6e
topology: v6e:2x2x1
jax: 0.10.0
libtpu: 0.0.40
codegen_flags: <defaults>
</compile_context>

<pallas_src>
import jax
import jax.numpy as jnp
from jax import lax
from jax.experimental import pallas as pl
from jax.experimental.pallas import tpu as pltpu


def spatial_attention_kernel(x_ref, wqkv_ref, bqkv_ref, gamma_ref, out_ref):
    """One batch image per grid step.

    x_ref    : (1, C, N)  VMEM   -- channels on sublanes, pixels on lanes
    wqkv_ref : (F, C)     VMEM   -- fused [Wq; Wk; Wv]^T, F = 2*Cq + C
    bqkv_ref : (F, 1)     VMEM
    gamma_ref: (1,)       SMEM
    out_ref  : (1, C, N)  VMEM
    """
    c = x_ref.shape[1]
    f = wqkv_ref.shape[0]
    cq = (f - c) // 2

    x = x_ref[0]                                               # (C, N) f32

    # Fused 1x1 convs: one lane-dense matmul instead of three skinny ones.
    qkv = jnp.dot(wqkv_ref[...], x,
                  preferred_element_type=jnp.float32) + bqkv_ref[...]  # (F, N)
    q = qkv[0:cq]          # (Cq, N)
    k = qkv[cq:2 * cq]     # (Cq, N)
    v = qkv[2 * cq:]       # (C,  N)

    # energy^T[j, i] = <k_j, q_i>; contract the channel axis directly
    # (no k.T materialised).  bf16 inputs, f32 accumulation on the MXU.
    energy_t = lax.dot_general(
        k.astype(jnp.bfloat16), q.astype(jnp.bfloat16),
        dimension_numbers=(((0,), (0,)), ((), ())),
        preferred_element_type=jnp.float32)                    # (N_key, N_query)

    # Softmax over keys (axis 0, sublanes) in f32; per-query stats are a
    # lane-dense (1, N) row that broadcasts straight onto the (C, N) output.
    m = jnp.max(energy_t, axis=0, keepdims=True)               # (1, N)
    p = jnp.exp(energy_t - m)                                  # (N, N) f32
    s = jnp.sum(p, axis=0, keepdims=True)                      # (1, N)
    inv = pl.reciprocal(s, approx=True)                        # EUP slot, ~free

    # out[c, i] = sum_j v[c, j] * p[j, i]; normalise AFTER the PV matmul.
    out_cn = jnp.dot(v.astype(jnp.bfloat16), p.astype(jnp.bfloat16),
                     preferred_element_type=jnp.float32)       # (C, N)

    gamma = gamma_ref[0]
    out_ref[0] = (gamma * 0.01 * out_cn * inv + x).astype(out_ref.dtype)


def spatial_attention(x, wq, bq, wk, bk, wv, bv, gamma):
    """x: (B, C, H, W) float32 (NCHW, like the PyTorch module).

    wq/wk: (C, Cq) and wv: (C, C), stored as (in, out); bq/bk: (Cq,);
    bv: (C,); gamma: (1,).
    """
    B, C, H, W = x.shape
    N = H * W
    Cq = wq.shape[1]
    F = 2 * Cq + C

    # NCHW -> (B, C, N): pure reshape, no transpose (pixel i = h*W + w, the
    # same flatten order as .view in the PyTorch module).
    x_cn = x.reshape(B, C, N)

    # Fuse the three projections into a single (F, C) weight / (F, 1) bias.
    w_qkv = jnp.concatenate([wq.T, wk.T, wv.T], axis=0)        # (F, C)
    b_qkv = jnp.concatenate([bq, bk, bv]).reshape(F, 1)        # (F, 1)
    gamma1 = gamma.reshape(1)

    out_cn = pl.pallas_call(
        spatial_attention_kernel,
        out_shape=jax.ShapeDtypeStruct((B, C, N), x.dtype),
        grid_spec=pltpu.PrefetchScalarGridSpec(
            num_scalar_prefetch=0,
            grid=(B,),
            in_specs=[
                pl.BlockSpec((1, C, N), lambda b: (b, 0, 0)),       # x
                pl.BlockSpec((F, C), lambda b: (0, 0)),             # fused W
                pl.BlockSpec((F, 1), lambda b: (0, 0)),             # fused bias
                pl.BlockSpec(memory_space=pltpu.MemorySpace.SMEM),  # gamma
            ],
            out_specs=pl.BlockSpec((1, C, N), lambda b: (b, 0, 0)),
        ),
        compiler_params=pltpu.CompilerParams(
            dimension_semantics=("parallel",),
            vmem_limit_bytes=32 * 1024 * 1024,
        ),
    )(x_cn, w_qkv, b_qkv, gamma1)

    # (B, C, N) -> NCHW: pure reshape, no transpose.
    return out_cn.reshape(B, C, H, W)


def spatial_attention_ref(x, wq, bq, wk, bk, wv, bv, gamma):
    """Pure-JAX f32 reference mirroring the PyTorch forward."""
    B, C, H, W = x.shape
    N = H * W
    x_flat = jnp.transpose(x.reshape(B, C, N), (0, 2, 1))      # (B, N, C)
    q = x_flat @ wq + bq                                       # (B, N, Cq)
    k = x_flat @ wk + bk                                       # (B, N, Cq)
    v = x_flat @ wv + bv                                       # (B, N, C)
    energy = jnp.einsum('bic,bjc->bij', q, k)
    attn = jax.nn.softmax(energy, axis=-1)
    out = jnp.einsum('bij,bjc->bic', attn, v)
    out = gamma[0] * out * 0.01 + x_flat
    return jnp.transpose(out, (0, 2, 1)).reshape(B, C, H, W)


if __name__ == "__main__":
    key = jax.random.PRNGKey(0)
    B, C, H, W = 2, 16, 8, 8     # in_dim = 16  ->  C//8 = 2
    Cq = C // 8

    ks = jax.random.split(key, 8)
    x  = jax.random.normal(ks[0], (B, C, H, W), dtype=jnp.float32)
    # Conv2d(in_dim, in_dim//8, 1) weights: (out, in, 1, 1) -> stored as (in, out)
    wq = jax.random.normal(ks[1], (C, Cq), dtype=jnp.float32) * 0.1
    bq = jax.random.normal(ks[2], (Cq,),   dtype=jnp.float32) * 0.1
    wk = jax.random.normal(ks[3], (C, Cq), dtype=jnp.float32) * 0.1
    bk = jax.random.normal(ks[4], (Cq,),   dtype=jnp.float32) * 0.1
    wv = jax.random.normal(ks[5], (C, C),  dtype=jnp.float32) * 0.1
    bv = jax.random.normal(ks[6], (C,),    dtype=jnp.float32) * 0.1
    # module init is torch.zeros(1); use a nonzero value so the attention path
    # actually contributes to the output being tested.
    gamma = jnp.array([0.7], dtype=jnp.float32)

    out = spatial_attention(x, wq, bq, wk, bk, wv, bv, gamma)
    out = jax.block_until_ready(out)

    ref = spatial_attention_ref(x, wq, bq, wk, bk, wv, bv, gamma)
    assert out.shape == (B, C, H, W)
    # bf16 matmuls + approx reciprocal vs f32 reference (attention branch is
    # further scaled by gamma*0.01, so the error budget is generous).
    assert jnp.allclose(out, ref, atol=2e-3, rtol=2e-3), "mismatch vs reference"

    print("KERNEL_OK")
</pallas_src>

<mosaic_0001>
module attributes {stable_mosaic.version = 11 : i64} {
  func.func @spatial_attention_kernel(%arg0: i32, %arg1: memref<1x16x64xf32, #tpu.memory_space<vmem>>, %arg2: memref<20x16xf32, #tpu.memory_space<vmem>>, %arg3: memref<20x1xf32, #tpu.memory_space<vmem>>, %arg4: memref<1xf32, #tpu.memory_space<smem>>, %arg5: memref<1x16x64xf32, #tpu.memory_space<vmem>>) attributes {dimension_semantics = [#tpu.dimension_semantics<parallel>], iteration_bounds = array<i64: 2>, scalar_prefetch = 0 : i64, scratch_operands = 0 : i64, tpu.core_type = #tpu.core_type<tc>, window_params = [{transform_indices = @transform_0, window_bounds = array<i64: 1, 16, 64>}, {pipeline_mode = #tpu.pipeline_mode<synchronous>, transform_indices = @transform_1, window_bounds = array<i64: 20, 16>}, {pipeline_mode = #tpu.pipeline_mode<synchronous>, transform_indices = @transform_2, window_bounds = array<i64: 20, 1>}, {transform_indices = @transform_3, window_bounds = array<i64: 1>}, {transform_indices = @transform_4, window_bounds = array<i64: 1, 16, 64>}]} {
    %c0 = arith.constant 0 : index
    %c0_0 = arith.constant 0 : index
    %c0_1 = arith.constant 0 : index
    %0 = vector.load %arg1[%c0, %c0_0, %c0_1] : memref<1x16x64xf32, #tpu.memory_space<vmem>>, vector<1x16x64xf32>
    %1 = vector.shape_cast %0 : vector<1x16x64xf32> to vector<16x64xf32>
    %c0_2 = arith.constant 0 : index
    %c0_3 = arith.constant 0 : index
    %2 = vector.load %arg2[%c0_2, %c0_3] : memref<20x16xf32, #tpu.memory_space<vmem>>, vector<20x16xf32>
    %cst = arith.constant dense<0.000000e+00> : vector<20x64xf32>
    %3 = tpu.matmul %2, %1, %cst {dimension_numbers = #tpu.dot_dimension_numbers<[1], [0], [0], [1], [0, 0, 1, 1], [], []>} : vector<20x16xf32>, vector<16x64xf32>, vector<20x64xf32> -> vector<20x64xf32>
    %c0_4 = arith.constant 0 : index
    %c0_5 = arith.constant 0 : index
    %4 = vector.load %arg3[%c0_4, %c0_5] : memref<20x1xf32, #tpu.memory_space<vmem>>, vector<20x1xf32>
    %5 = vector.broadcast %4 : vector<20x1xf32> to vector<20x64xf32>
    %6 = arith.addf %3, %5 : vector<20x64xf32>
    %7 = vector.extract_strided_slice %6 {offsets = [0, 0], sizes = [2, 64], strides = [1, 1]} : vector<20x64xf32> to vector<2x64xf32>
    %8 = vector.extract_strided_slice %6 {offsets = [2, 0], sizes = [2, 64], strides = [1, 1]} : vector<20x64xf32> to vector<2x64xf32>
    %9 = vector.extract_strided_slice %6 {offsets = [4, 0], sizes = [16, 64], strides = [1, 1]} : vector<20x64xf32> to vector<16x64xf32>
    %10 = arith.truncf %8 : vector<2x64xf32> to vector<2x64xbf16>
    %11 = arith.truncf %7 : vector<2x64xf32> to vector<2x64xbf16>
    %cst_6 = arith.constant dense<0.000000e+00> : vector<64x64xf32>
    %12 = tpu.matmul %10, %11, %cst_6 {dimension_numbers = #tpu.dot_dimension_numbers<[0], [0], [1], [1], [0, 1, 1, 1], [], []>} : vector<2x64xbf16>, vector<2x64xbf16>, vector<64x64xf32> -> vector<64x64xf32>
    %cst_7 = arith.constant dense<0xFF800000> : vector<64xf32>
    %13 = vector.multi_reduction <maximumf>, %12, %cst_7 [0] : vector<64x64xf32> to vector<64xf32>
    %14 = vector.shape_cast %13 : vector<64xf32> to vector<1x64xf32>
    %15 = vector.broadcast %14 : vector<1x64xf32> to vector<64x64xf32>
    %16 = arith.subf %12, %15 : vector<64x64xf32>
    %17 = math.exp %16 : vector<64x64xf32>
    %cst_8 = arith.constant dense<0.000000e+00> : vector<64xf32>
    %18 = vector.multi_reduction <add>, %17, %cst_8 [0] : vector<64x64xf32> to vector<64xf32>
    %19 = vector.shape_cast %18 : vector<64xf32> to vector<1x64xf32>
    %20 = tpu.reciprocal %19 {approx = true} : vector<1x64xf32> -> vector<1x64xf32>
    %21 = arith.truncf %9 : vector<16x64xf32> to vector<16x64xbf16>
    %22 = arith.truncf %17 : vector<64x64xf32> to vector<64x64xbf16>
    %cst_9 = arith.constant dense<0.000000e+00> : vector<16x64xf32>
    %23 = tpu.matmul %21, %22, %cst_9 {dimension_numbers = #tpu.dot_dimension_numbers<[1], [0], [0], [1], [0, 0, 1, 1], [], []>} : vector<16x64xbf16>, vector<64x64xbf16>, vector<16x64xf32> -> vector<16x64xf32>
    %c0_10 = arith.constant 0 : index
    %24 = memref.load %arg4[%c0_10] : memref<1xf32, #tpu.memory_space<smem>>
    %cst_11 = arith.constant 0.00999999977 : f32
    %25 = arith.mulf %24, %cst_11 : f32
    %26 = vector.broadcast %25 : f32 to vector<16x64xf32>
    %27 = arith.mulf %26, %23 : vector<16x64xf32>
    %28 = vector.broadcast %20 : vector<1x64xf32> to vector<16x64xf32>
    %29 = arith.mulf %27, %28 : vector<16x64xf32>
    %30 = arith.addf %29, %1 : vector<16x64xf32>
    %c0_12 = arith.constant 0 : index
    %c0_13 = arith.constant 0 : index
    %c0_14 = arith.constant 0 : index
    %31 = vector.load %arg5[%c0_12, %c0_13, %c0_14] : memref<1x16x64xf32, #tpu.memory_space<vmem>>, vector<1x16x64xf32>
    %32 = vector.shape_cast %31 : vector<1x16x64xf32> to vector<16x64xf32>
    %33 = vector.shape_cast %30 : vector<16x64xf32> to vector<1x16x64xf32>
    tpu.vector_store %arg5[%c0_12, %c0_13, %c0_14], %33 {strides = array<i32>} : memref<1x16x64xf32, #tpu.memory_space<vmem>>, vector<1x16x64xf32>,
    return
  }
  func.func @transform_0(%arg0: i32) -> (i32, i32, i32) {
    %c0_i32 = arith.constant 0 : i32
    %c0_i32_0 = arith.constant 0 : i32
    %c0_i32_1 = arith.constant 0 : i32
    return %arg0, %c0_i32, %c0_i32_0 : i32, i32, i32
  }
  func.func @transform_1(%arg0: i32) -> (i32, i32) {
    %c0_i32 = arith.constant 0 : i32
    %c0_i32_0 = arith.constant 0 : i32
    %c0_i32_1 = arith.constant 0 : i32
    return %c0_i32, %c0_i32_0 : i32, i32
  }
  func.func @transform_2(%arg0: i32) -> (i32, i32) {
    %c0_i32 = arith.constant 0 : i32
    %c0_i32_0 = arith.constant 0 : i32
    %c0_i32_1 = arith.constant 0 : i32
    return %c0_i32, %c0_i32_0 : i32, i32
  }
  func.func @transform_3(%arg0: i32) -> i32 {
    %c0_i32 = arith.constant 0 : i32
    %c0_i32_0 = arith.constant 0 : i32
    return %c0_i32 : i32
  }
  func.func @transform_4(%arg0: i32) -> (i32, i32, i32) {
    %c0_i32 = arith.constant 0 : i32
    %c0_i32_0 = arith.constant 0 : i32
    %c0_i32_1 = arith.constant 0 : i32
    return %arg0, %c0_i32, %c0_i32_0 : i32, i32, i32
  }
}

</mosaic_0001>

<llo_original>
// kernel: tpu_custom_call.1
$region0: #{tpu_custom_call.1}
  #allocation0 [shape = 'u32[]', space=smem, size = 0x4, offset = 0x4, fixed_abs, tag = 'smem constant byte address 0x4 - core index']
  #allocation1 [shape = 'u32[144,128]{1,0:T(1,128)}', space=vmem, size = 0x12000, scoped, tag = 'internal scratch']
  #allocation2 [shape = 'f32[1]{0:T(128)S(6)}', space=smem, size = 0x200, scoped, tag = 'scoped memory for tpu_custom_call.1']
  %s0 = inlined_call_operand.vmem [shape: f32[2,16,64], index: 0, kind: input, shape index: {}]
  %s1 = inlined_call_operand.vmem [shape: f32[20,16], index: 1, kind: input, shape index: {}]
  %s2 = inlined_call_operand.vmem [shape: f32[20,1], index: 2, kind: input, shape index: {}]
  %s3 = inlined_call_operand.<no memory space> [shape: f32[1], index: 3, kind: input, shape index: {}]
  %s4 = inlined_call_operand.hbm [shape: f32[2,16,64], index: 4, kind: output, shape index: {}]
  %s5 = sld [smem:[#allocation0]]
  $region49: #{tpu_custom_call.1} parent=0
    _
  %s7 = ssub.s32 1, %s5
  %s8 = scalar_select 0, %s7, %s5
  %9 = sst [smem:[#allocation2]] %s3
  $region1: #{tpu_custom_call.1} parent=0
    #allocation3 [shape = 'u8[16384]{0}', space=vmem, size = 0x4000, scoped, tag = 'output window, operand 0']
    #allocation4 [shape = 's32[2]{0}', space=sflag, size = 0x8, scoped, tag = 'scoped memory for tpu_custom_call.1']
    %10 = vsyncpa [#allocation4], 0
    %s11 = scalar_lea.sflag [#allocation4], 1
    %12 = vsyncpa %s11, 0
    loop: start=0, step=1, limit=4
    $region2: #{tpu_custom_call.1} parent=1 // loop_pre_header
      _
    $region3: #{tpu_custom_call.1} parent=1 // loop_header
      %s14 = sphi 0, %s18
      %p15 = scmp.ge.s32.totalorder %s14, 4
      %s24 = sphi 0, %s26
      %s27 = sphi 0, %s24
      %s28 = sphi 0, %s27
      %s44 = sphi 0, %s28
      %s48 = sphi 0, %s48
      %s50 = sphi 0, %s48
      %s51 = sphi 0, %s50
      %s65 = sphi 0, %s51
      %s69 = sphi 0, %s69
      %s71 = sphi 0, %s69
      %s72 = sphi 0, %s71
      %s86 = sphi 0, %s72
      %s90 = sphi 0, %s90
      %s92 = sphi 0, %s90
      %s93 = sphi 0, %s92
      %s107 = sphi 0, %s93
      %s113 = sphi 0, %s115
      %s116 = sphi 0, %s113
      %s117 = sphi 0, %s116
      %s133 = sphi 0, %s117
    $region4: #{tpu_custom_call.1} parent=1 // loop_header_branch
      %17 = sbr.rel (%p15) target = $region8
    $region5: #{tpu_custom_call.1} parent=1 // loop_body
      %s19 = ssub.s32 %s14, 1
      %s20 = ssub.s32 %s14, 2
      %s21 = sadd.s32 %s14, 1
      %s22 = ssub.s32 %s14, %s21
      %p23 = scmp.eq.s32.totalorder %s22, 0
      %s25 = sadd.s32 %s24, 1
      %s26 = scalar_select %p23, %s24, %s25
      %p29 = pneg %p23
      %p30 = scmp.eq.s32.totalorder %s14, 1
      %p31 = por %p29, %p30
      %p32 = scmp.ne.s32.totalorder %s24, %s27
      %p33 = scmp.eq.s32.totalorder %s14, 0
      %p34 = por %p32, %p33
      %p35 = scmp.ne.s32.totalorder %s24, %s27
      %p36 = scmp.eq.s32.totalorder %s19, 1
      %p37 = por %p35, %p36
      %p38 = scmp.ne.s32.totalorder %s27, %s28
      %p39 = scmp.eq.s32.totalorder %s19, 0
      %p40 = por %p38, %p39
      %p41 = scmp.ne.s32.totalorder %s27, %s28
      %p42 = scmp.eq.s32.totalorder %s20, 1
      %p43 = por %p41, %p42
      %p45 = scmp.ne.s32.totalorder %s28, %s44
      %p46 = scmp.eq.s32.totalorder %s20, 0
      %p47 = por %p45, %p46
      %s49 = sadd.s32 %s48, 1
      %p52 = scmp.eq.s32.totalorder %s14, 1
      %p53 = scmp.ne.s32.totalorder %s48, %s50
      %p54 = scmp.eq.s32.totalorder %s14, 0
      %p55 = por %p53, %p54
      %p56 = scmp.ne.s32.totalorder %s48, %s50
      %p57 = scmp.eq.s32.totalorder %s19, 1
      %p58 = por %p56, %p57
      %p59 = scmp.ne.s32.totalorder %s50, %s51
      %p60 = scmp.eq.s32.totalorder %s19, 0
      %p61 = por %p59, %p60
      %p62 = scmp.ne.s32.totalorder %s50, %s51
      %p63 = scmp.eq.s32.totalorder %s20, 1
      %p64 = por %p62, %p63
      %p66 = scmp.ne.s32.totalorder %s51, %s65
      %p67 = scmp.eq.s32.totalorder %s20, 0
      %p68 = por %p66, %p67
      %s70 = sadd.s32 %s69, 1
      %p73 = scmp.eq.s32.totalorder %s14, 1
      %p74 = scmp.ne.s32.totalorder %s69, %s71
      %p75 = scmp.eq.s32.totalorder %s14, 0
      %p76 = por %p74, %p75
      %p77 = scmp.ne.s32.totalorder %s69, %s71
      %p78 = scmp.eq.s32.totalorder %s19, 1
      %p79 = por %p77, %p78
      %p80 = scmp.ne.s32.totalorder %s71, %s72
      %p81 = scmp.eq.s32.totalorder %s19, 0
      %p82 = por %p80, %p81
      %p83 = scmp.ne.s32.totalorder %s71, %s72
      %p84 = scmp.eq.s32.totalorder %s20, 1
      %p85 = por %p83, %p84
      %p87 = scmp.ne.s32.totalorder %s72, %s86
      %p88 = scmp.eq.s32.totalorder %s20, 0
      %p89 = por %p87, %p88
      %s91 = sadd.s32 %s90, 1
      %p94 = scmp.eq.s32.totalorder %s14, 1
      %p95 = scmp.ne.s32.totalorder %s90, %s92
      %p96 = scmp.eq.s32.totalorder %s14, 0
      %p97 = por %p95, %p96
      %p98 = scmp.ne.s32.totalorder %s90, %s92
      %p99 = scmp.eq.s32.totalorder %s19, 1
      %p100 = por %p98, %p99
      %p101 = scmp.ne.s32.totalorder %s92, %s93
      %p102 = scmp.eq.s32.totalorder %s19, 0
      %p103 = por %p101, %p102
      %p104 = scmp.ne.s32.totalorder %s92, %s93
      %p105 = scmp.eq.s32.totalorder %s20, 1
      %p106 = por %p104, %p105
      %p108 = scmp.ne.s32.totalorder %s93, %s107
      %p109 = scmp.eq.s32.totalorder %s20, 0
      %p110 = por %p108, %p109
      %s111 = ssub.s32 %s14, %s21
      %p112 = scmp.eq.s32.totalorder %s111, 0
      %s114 = sadd.s32 %s113, 1
      %s115 = scalar_select %p112, %s113, %s114
      %p118 = pneg %p112
      %p119 = scmp.eq.s32.totalorder %s14, 1
      %p120 = por %p118, %p119
      %p121 = scmp.ne.s32.totalorder %s113, %s116
      %p122 = scmp.eq.s32.totalorder %s14, 0
      %p123 = por %p121, %p122
      %p124 = scmp.ne.s32.totalorder %s113, %s116
      %p125 = scmp.eq.s32.totalorder %s19, 1
      %p126 = por %p124, %p125
      %p127 = scmp.ne.s32.totalorder %s116, %s117
      %p128 = scmp.eq.s32.totalorder %s19, 0
      %p129 = por %p127, %p128
      %p130 = scmp.ne.s32.totalorder %s116, %s117
      %p131 = scmp.eq.s32.totalorder %s20, 1
      %p132 = por %p130, %p131
      %p134 = scmp.ne.s32.totalorder %s117, %s133
      %p135 = scmp.eq.s32.totalorder %s20, 0
      %p136 = por %p134, %p135
      %p137 = scmp.le.s32.totalorder 1, %s14
      %p138 = scmp.lt.s32.totalorder %s14, 3
      %p139 = pnand %p137, %p138
      %p140 = pneg %p139
      // Predicated region
      $region9: #{tpu_custom_call.1} parent=5 // pred_check
        _
      $region10: #{tpu_custom_call.1} parent=5 // pred_check_branch
        %142 = sbr.rel (%p139) target = $region12
      $region11: #{tpu_custom_call.1} parent=5 // pred_region
        %s143 = ssub.s32 %s14, 1
        // Predicated region
        $region13: #{tpu_custom_call.1} parent=11 // pred_check
          %p144 = pneg %p61
        $region14: #{tpu_custom_call.1} parent=11 // pred_check_branch
          %146 = sbr.rel (%p144) target = $region16
        $region15: #{tpu_custom_call.1} parent=11 // pred_region
          _
        $region16: #{tpu_custom_call.1} parent=11 // pred_fallthru
          _
        // Predicated region
        $region17: #{tpu_custom_call.1} parent=11 // pred_check
          %p147 = pneg %p82
        $region18: #{tpu_custom_call.1} parent=11 // pred_check_branch
          %149 = sbr.rel (%p147) target = $region20
        $region19: #{tpu_custom_call.1} parent=11 // pred_region
          _
        $region20: #{tpu_custom_call.1} parent=11 // pred_fallthru
          _
        // Predicated region
        $region21: #{tpu_custom_call.1} parent=11 // pred_check
          %p150 = pneg %p103
        $region22: #{tpu_custom_call.1} parent=11 // pred_check_branch
          %152 = sbr.rel (%p150) target = $region24
        $region23: #{tpu_custom_call.1} parent=11 // pred_region
          _
        $region24: #{tpu_custom_call.1} parent=11 // pred_fallthru
          _
      $region12: #{tpu_custom_call.1} parent=5 // pred_fallthru
        _
      %p153 = scmp.lt.s32.totalorder %s14, 2
      // Predicated region
      $region25: #{tpu_custom_call.1} parent=5 // pred_check
        %p154 = pneg %p153
      $region26: #{tpu_custom_call.1} parent=5 // pred_check_branch
        %156 = sbr.rel (%p154) target = $region28
      $region27: #{tpu_custom_call.1} parent=5 // pred_region
        // Predicated region
        $region29: #{tpu_custom_call.1} parent=27 // pred_check
          %p157 = pneg %p34
        $region30: #{tpu_custom_call.1} parent=27 // pred_check_branch
          %159 = sbr.rel (%p157) target = $region32
        $region31: #{tpu_custom_call.1} parent=27 // pred_region
          %p160 = scmp.lt.s32.totalorder %s14, 1
          %s161 = scalar_select %p160, %s14, 1
          %s162 = smul.addr %s161, 2
          %s163 = smul.addr %s162, 8
          %s164 = scalar_lea.vmem %s0, %s163
        $region32: #{tpu_custom_call.1} parent=27 // pred_fallthru
          _
      $region28: #{tpu_custom_call.1} parent=5 // pred_fallthru
        _
      %p165 = scmp.le.s32.totalorder 1, %s14
      %p166 = scmp.lt.s32.totalorder %s14, 3
      %p167 = pnand %p165, %p166
      %p168 = pneg %p167
      // Predicated region
      $region33: #{tpu_custom_call.1} parent=5 // pred_check
        _
      $region34: #{tpu_custom_call.1} parent=5 // pred_check_branch
        %170 = sbr.rel (%p167) target = $region36
      $region35: #{tpu_custom_call.1} parent=5 // pred_region
        %s171 = ssub.s32 %s14, 1
        %p172 = scmp.lt.s32.totalorder %s19, 1
        %s173 = scalar_select %p172, %s19, 1
        %s174 = smul.addr %s173, 2
        %s175 = smul.addr %s174, 8
        %s176 = scalar_lea.vmem %s0, %s175
        %p177 = pneg %p40
        %p178 = pneg %p37
        %p179 = pneg %p61
        %p180 = pneg %p58
        %p181 = pneg %p82
        %p182 = pneg %p79
        %p183 = pneg %p103
        %p184 = pneg %p100
        %p185 = pneg %p129
        %p186 = pneg %p126
        %s187 = sand.u32 %s116, 1
        %s188 = scalar_lea.sflag [#allocation4], %s187
        %s189 = sand.u32 %s116, 1
        %s190 = smul.addr %s189, 16
        %s191 = scalar_lea.vmem [#allocation3], %s190
        %p192 = scmp.lt.s32.totalorder %s19, 1
        %s193 = scalar_select %p192, %s19, 1
        %s194 = smul.addr %s193, 2
        %s195 = smul.addr %s194, 8
        %s196 = scalar_lea.vmem %s0, %s195
        %v198 = vld [vmem:[%s196] sm:$0xff]
        %v199 = vld [vmem:[%s196 + $0x8] sm:$0xff]
        %v200 = vld [vmem:[%s1] sm:$0xff]
        %v201 = vld [vmem:[%s1 + $0x8] sm:$0xff]
        %v202 = vld [vmem:[%s1 + $0x10] sm:$0xf]
        %v203 = vld [vmem:[%s2] sm:$0xff]
        %v204 = vld [vmem:[%s2 + $0x8] sm:$0xff]
        %v205 = vld [vmem:[%s2 + $0x10] sm:$0xf]
        %207 = vset.pattern.permute.xlu0 0
        %208 = vperm.xlu0 %207, %v203
        %v209 = vpop.permute.xlu0 %208
        %212 = vset.pattern.permute.xlu0 0
        %213 = vperm.xlu0 %212, %v204
        %v214 = vpop.permute.xlu0 %213
        %217 = vset.pattern.permute.xlu0 0
        %218 = vperm.xlu0 %217, %v205
        %v219 = vpop.permute.xlu0 %218
        %vm221 = vcmask 130048
        %v223 = vsel %vm221, %v200, 0
        %v226 = vsel %vm221, %v201, 0
        %v229 = vsel %vm221, %v202, 0
        %231 = vmatprep.subr.mxu0 0.0
        %232 = vmatpush1.msra.mxu0 0.0
        %233 = vmatprep.subr.mxu0 0.0
        %234 = vmatpush1.msra.mxu0 0.0
        %235 = vmatprep.subr.mxu0 0.0
        %236 = vmatpush1.msra.mxu0 0.0
        %237 = vmatprep.subr.mxu0 0.0
        %238 = vmatpush1.msra.mxu0 0.0
        %239 = vmatprep.subr.mxu0 0.0
        %240 = vmatpush1.msra.mxu0 0.0
        %241 = vmatprep.subr.mxu0 0.0
        %242 = vmatpush1.msra.mxu0 0.0
        %243 = vmatprep.subr.mxu0 0.0
        %244 = vmatpush1.msra.mxu0 0.0
        %245 = vmatprep.subr.mxu0 0.0
        %246 = vmatpush1.msra.mxu0 0.0
        %247 = vmatprep.subr.mxu0 0.0
        %248 = vmatpush1.msra.mxu0 0.0
        %249 = vmatprep.subr.mxu0 0.0
        %250 = vmatpush1.msra.mxu0 0.0
        %251 = vmatprep.subr.mxu0 0.0
        %252 = vmatpush1.msra.mxu0 0.0
        %253 = vmatprep.subr.mxu0 0.0
        %254 = vmatpush1.msra.mxu0 0.0
        %255 = vmatprep.subr.mxu0 0.0
        %256 = vmatpush1.msra.mxu0 0.0
        %257 = vmatprep.subr.mxu0 0.0
        %258 = vmatpush1.msra.mxu0 0.0
        %259 = vmatprep.subr.mxu0 0.0
        %260 = vmatpush1.msra.mxu0 %v199
        %261 = vmatprep.subr.mxu0 0.0
        %262 = vmatpush1.msra.mxu0 %v198
        %263 = vmatprep.subr.mxu0 0.0
        %264 = vmatpush2.msra.mxu0 0.0
        %265 = vmatprep.subr.mxu0 0.0
        %266 = vmatpush2.msra.mxu0 0.0
        %267 = vmatprep.subr.mxu0 0.0
        %268 = vmatpush2.msra.mxu0 0.0
        %269 = vmatprep.subr.mxu0 0.0
        %270 = vmatpush2.msra.mxu0 0.0
        %271 = vmatprep.subr.mxu0 0.0
        %272 = vmatpush2.msra.mxu0 0.0
        %273 = vmatprep.subr.mxu0 0.0
        %274 = vmatpush2.msra.mxu0 0.0
        %275 = vmatprep.subr.mxu0 0.0
        %276 = vmatpush2.msra.mxu0 0.0
        %277 = vmatprep.subr.mxu0 0.0
        %278 = vmatpush2.msra.mxu0 0.0
        %279 = vmatprep.subr.mxu0 0.0
        %280 = vmatpush2.msra.mxu0 0.0
        %281 = vmatprep.subr.mxu0 0.0
        %282 = vmatpush2.msra.mxu0 0.0
        %283 = vmatprep.subr.mxu0 0.0
        %284 = vmatpush2.msra.mxu0 0.0
        %285 = vmatprep.subr.mxu0 0.0
        %286 = vmatpush2.msra.mxu0 0.0
        %287 = vmatprep.subr.mxu0 0.0
        %288 = vmatpush2.msra.mxu0 0.0
        %289 = vmatprep.subr.mxu0 0.0
        %290 = vmatpush2.msra.mxu0 0.0
        %291 = vmatprep.subr.mxu0 0.0
        %292 = vmatpush2.msra.mxu0 0.0
        %293 = vmatprep.subr.mxu0 0.0
        %294 = vmatpush2.msra.mxu0 0.0
        %295 = vmatprep.mubr.f32.mxu0 0.0
        %296 = vmatmul.mubr.f32.gmra.mxu0 %v223
        %v297 = vpop.f32.mrf.mxu0
        %v298 = vadd.f32 %v209, %v297
        %v299 = vpop.f32.mrf.mxu0
        %300 = vmatprep.mubr.f32.mxu0 0.0
        %301 = vmatmul.mubr.f32.gmra.mxu0 %v226
        %v302 = vpop.f32.mrf.mxu0
        %v303 = vadd.f32 %v214, %v302
        %v304 = vpop.f32.mrf.mxu0
        %305 = vmatprep.mubr.f32.mxu0 0.0
        %306 = vmatmul.mubr.f32.gmra.mxu0 %v229
        %v307 = vpop.f32.mrf.mxu0
        %v308 = vadd.f32 %v219, %v307
        %v309 = vpop.f32.mrf.mxu0
        %310 = vdwg.mxu0
        %v311 = vpack.c.bf16 %v298, %v298
        %v313 = vrot.slane %v311, 1
        %315 = vxpose.xlu0.c.b16.start [1/8] %v313, 128
        %316 = vxpose.xlu0.c.b16.cont [2/8] 0, 128
        %317 = vxpose.xlu0.c.b16.cont [3/8] 0, 128
        %318 = vxpose.xlu0.c.b16.cont [4/8] 0, 128
        %319 = vxpose.xlu0.c.b16.cont [5/8] 0, 128
        %320 = vxpose.xlu0.c.b16.cont [6/8] 0, 128
        %321 = vxpose.xlu0.c.b16.cont [7/8] 0, 128
        %322 = vxpose.xlu0.c.b16.end [8/8] 0, 128
        %v323 = vpop.trf.xlu0
        %v324 = vpop.trf.xlu0
        %v325 = vpop.trf.xlu0
        %v326 = vpop.trf.xlu0
        %v327 = vpop.trf.xlu0
        %v328 = vpop.trf.xlu0
        %v329 = vpop.trf.xlu0
        %v330 = vpop.trf.xlu0
        %vm331 = vcmask 15360
        %v333 = vsel %vm331, %v323, 0
        %v336 = vsel %vm331, %v324, 0
        %v339 = vsel %vm331, %v325, 0
        %v342 = vsel %vm331, %v326, 0
        %vm344 = vcmask 1040384
        %v346 = vsel %vm344, %v311, 0
        %348 = vmatprep.subr.bf16.mxu0 0
        %349 = vmatpush1.bf16.msra.mxu0 0
        %350 = vmatprep.subr.bf16.mxu0 0
        %351 = vmatpush1.bf16.msra.mxu0 0
        %352 = vmatprep.subr.bf16.mxu0 0
        %353 = vmatpush1.bf16.msra.mxu0 0
        %354 = vmatprep.subr.bf16.mxu0 0
        %355 = vmatpush1.bf16.msra.mxu0 0
        %356 = vmatprep.subr.bf16.mxu0 0
        %357 = vmatpush1.bf16.msra.mxu0 0
        %358 = vmatprep.subr.bf16.mxu0 0
        %359 = vmatpush1.bf16.msra.mxu0 0
        %360 = vmatprep.subr.bf16.mxu0 0
        %361 = vmatpush1.bf16.msra.mxu0 0
        %362 = vmatprep.subr.bf16.mxu0 0
        %363 = vmatpush1.bf16.msra.mxu0 %v346
        %364 = vmatprep.subr.bf16.mxu0 0
        %365 = vmatpush2.bf16.msra.mxu0 0
        %366 = vmatprep.subr.bf16.mxu0 0
        %367 = vmatpush2.bf16.msra.mxu0 0
        %368 = vmatprep.subr.bf16.mxu0 0
        %369 = vmatpush2.bf16.msra.mxu0 0
        %370 = vmatprep.subr.bf16.mxu0 0
        %371 = vmatpush2.bf16.msra.mxu0 0
        %372 = vmatprep.subr.bf16.mxu0 0
        %373 = vmatpush2.bf16.msra.mxu0 0
        %374 = vmatprep.subr.bf16.mxu0 0
        %375 = vmatpush2.bf16.msra.mxu0 0
        %376 = vmatprep.subr.bf16.mxu0 0
        %377 = vmatpush2.bf16.msra.mxu0 0
        %378 = vmatprep.subr.bf16.mxu0 0
        %379 = vmatpush2.bf16.msra.mxu0 0
        %380 = vmatprep.mubr.bf16.mxu0 0
        %381 = vmatmul.mubr.bf16.gmra.mxu0 %v333
        %v382 = vpop.f32.mrf.mxu0
        %v383 = vadd.f32 0.0, %v382
        %v384 = vpop.f32.mrf.mxu0
        %v385 = vpop.f32.mrf.mxu0
        %v386 = vadd.f32 0.0, %v385
        %v387 = vpop.f32.mrf.mxu0
        %388 = vmatprep.mubr.bf16.mxu0 0
        %389 = vmatmul.mubr.bf16.gmra.mxu0 %v336
        %v390 = vpop.f32.mrf.mxu0
        %v391 = vadd.f32 0.0, %v390
        %v392 = vpop.f32.mrf.mxu0
        %v393 = vpop.f32.mrf.mxu0
        %v394 = vadd.f32 0.0, %v393
        %v395 = vpop.f32.mrf.mxu0
        %396 = vmatprep.mubr.bf16.mxu0 0
        %397 = vmatmul.mubr.bf16.gmra.mxu0 %v339
        %v398 = vpop.f32.mrf.mxu0
        %v399 = vadd.f32 0.0, %v398
        %v400 = vpop.f32.mrf.mxu0
        %v401 = vpop.f32.mrf.mxu0
        %v402 = vadd.f32 0.0, %v401
        %v403 = vpop.f32.mrf.mxu0
        %404 = vmatprep.mubr.bf16.mxu0 0
        %405 = vmatmul.mubr.bf16.gmra.mxu0 %v342
        %v406 = vpop.f32.mrf.mxu0
        %v407 = vadd.f32 0.0, %v406
        %v408 = vpop.f32.mrf.mxu0
        %v409 = vpop.f32.mrf.mxu0
        %v410 = vadd.f32 0.0, %v409
        %v411 = vpop.f32.mrf.mxu0
        %412 = vdwg.mxu0
        %vm413 = vcmask 523264
        %v414 = vsel %vm413, %v383, -inf
        %v415 = vsel %vm413, %v386, -inf
        %v416 = vsel %vm413, %v391, -inf
        %v417 = vsel %vm413, %v394, -inf
        %v418 = vsel %vm413, %v399, -inf
        %v419 = vmax.f32 %v414, %v418
        %v420 = vsel %vm413, %v402, -inf
        %v421 = vmax.f32 %v415, %v420
        %v422 = vsel %vm413, %v407, -inf
        %v423 = vmax.f32 %v416, %v422
        %v424 = vsel %vm413, %v410, -inf
        %v425 = vmax.f32 %v417, %v424
        %v426 = vmax.f32 %v419, %v421
        %v427 = vmax.f32 %v423, %v425
        %v428 = vmax.f32 %v426, %v427
        %v429 = vrot.slane %v428, 4
        %v430 = vmax.f32 %v428, %v429
        %v431 = vrot.slane %v430, 2
        %v432 = vmax.f32 %v430, %v431
        %v433 = vrot.slane %v432, 1
        %v434 = vmax.f32 %v432, %v433
        %v435 = vsub.f32 %v383, %v434
        %v436 = vsub.f32 %v386, %v434
        %v437 = vsub.f32 %v391, %v434
        %v438 = vsub.f32 %v394, %v434
        %v439 = vsub.f32 %v399, %v434
        %v440 = vsub.f32 %v402, %v434
        %v441 = vsub.f32 %v407, %v434
        %v442 = vsub.f32 %v410, %v434
        %v443 = vmul.f32 %v435, 1.442695
        %v444 = vpow.pop %v443
        %v445 = vmul.f32 %v436, 1.442695
        %v446 = vpow.pop %v445
        %v447 = vmul.f32 %v437, 1.442695
        %v448 = vpow.pop %v447
        %v449 = vmul.f32 %v438, 1.442695
        %v450 = vpow.pop %v449
        %v451 = vmul.f32 %v439, 1.442695
        %v452 = vpow.pop %v451
        %v453 = vmul.f32 %v440, 1.442695
        %v454 = vpow.pop %v453
        %v455 = vmul.f32 %v441, 1.442695
        %v456 = vpow.pop %v455
        %v457 = vmul.f32 %v442, 1.442695
        %v458 = vpow.pop %v457
        %v459 = vsel %vm413, %v444, 0.0
        %v460 = vsel %vm413, %v446, 0.0
        %v461 = vadd.f32 %v459, %v460
        %v462 = vsel %vm413, %v448, 0.0
        %v463 = vadd.f32 %v461, %v462
        %v464 = vsel %vm413, %v450, 0.0
        %v465 = vadd.f32 %v463, %v464
        %v466 = vsel %vm413, %v452, 0.0
        %v467 = vadd.f32 %v465, %v466
        %v468 = vsel %vm413, %v454, 0.0
        %v469 = vadd.f32 %v467, %v468
        %v470 = vsel %vm413, %v456, 0.0
        %v471 = vadd.f32 %v469, %v470
        %v472 = vsel %vm413, %v458, 0.0
        %v473 = vadd.f32 %v471, %v472
        %v474 = vrot.slane %v473, 4
        %v475 = vadd.f32 %v473, %v474
        %v476 = vrot.slane %v475, 2
        %v477 = vadd.f32 %v475, %v476
        %v478 = vrot.slane %v477, 1
        %v479 = vadd.f32 %v477, %v478
        %v480 = vrcp.pop %v479
        %v481 = vpack.c.bf16 %v303, %v298
        %v482 = vpack.c.bf16 %v308, %v308
        %v483 = vpack.c.bf16 %v446, %v444
        %v484 = vpack.c.bf16 %v450, %v448
        %v485 = vpack.c.bf16 %v454, %v452
        %v486 = vpack.c.bf16 %v458, %v456
        %vm489 = vcmask 1045504
        %v490 = vrot.slane %v481, 2
        %v491 = vrot.slane %v482, 2
        %v492 = vsel %vm489, %v490, %v491
        %v494 = vsel %vm413, %v492, 0
        %496 = vmatprep.subr.bf16.mxu0 0
        %497 = vmatpush1.bf16.msra.mxu0 0
        %498 = vmatprep.subr.bf16.mxu0 0
        %499 = vmatpush1.bf16.msra.mxu0 0
        %500 = vmatprep.subr.bf16.mxu0 0
        %501 = vmatpush1.bf16.msra.mxu0 0
        %502 = vmatprep.subr.bf16.mxu0 0
        %503 = vmatpush1.bf16.msra.mxu0 0
        %504 = vmatprep.subr.bf16.mxu0 0
        %505 = vmatpush1.bf16.msra.mxu0 %v486
        %506 = vmatprep.subr.bf16.mxu0 0
        %507 = vmatpush1.bf16.msra.mxu0 %v485
        %508 = vmatprep.subr.bf16.mxu0 0
        %509 = vmatpush1.bf16.msra.mxu0 %v484
        %510 = vmatprep.subr.bf16.mxu0 0
        %511 = vmatpush1.bf16.msra.mxu0 %v483
        %512 = vmatprep.subr.bf16.mxu0 0
        %513 = vmatpush2.bf16.msra.mxu0 0
        %514 = vmatprep.subr.bf16.mxu0 0
        %515 = vmatpush2.bf16.msra.mxu0 0
        %516 = vmatprep.subr.bf16.mxu0 0
        %517 = vmatpush2.bf16.msra.mxu0 0
        %518 = vmatprep.subr.bf16.mxu0 0
        %519 = vmatpush2.bf16.msra.mxu0 0
        %520 = vmatprep.subr.bf16.mxu0 0
        %521 = vmatpush2.bf16.msra.mxu0 0
        %522 = vmatprep.subr.bf16.mxu0 0
        %523 = vmatpush2.bf16.msra.mxu0 0
        %524 = vmatprep.subr.bf16.mxu0 0
        %525 = vmatpush2.bf16.msra.mxu0 0
        %526 = vmatprep.subr.bf16.mxu0 0
        %527 = vmatpush2.bf16.msra.mxu0 0
        %528 = vmatprep.mubr.bf16.mxu0 0
        %529 = vmatmul.mubr.bf16.gmra.mxu0 %v494
        %v530 = vpop.f32.mrf.mxu0
        %v531 = vadd.f32 0.0, %v530
        %v532 = vpop.f32.mrf.mxu0
        %v533 = vpop.f32.mrf.mxu0
        %v534 = vadd.f32 0.0, %v533
        %v535 = vpop.f32.mrf.mxu0
        %536 = vdwg.mxu0
        %s537 = sld [smem:[#allocation2]]
        %s538 = smul.f32 %s537, 0.01
        %v539 = vstv %s538
        %v540 = vmul.f32 %v539, %v531
        %v541 = vmul.f32 %v539, %v534
        %v542 = vmul.f32 %v540, %v480
        %v543 = vmul.f32 %v541, %v480
        %v544 = vadd.f32 %v542, %v198
        %v545 = vadd.f32 %v543, %v199
        %546 = vst.msk [vmem:[%s191] sm:$0xff] %vm413, %v544
        %547 = vst.msk [vmem:[%s191 + $0x8] sm:$0xff] %vm413, %v545
        %s548 = sand.u32 %s116, 1
        %s549 = scalar_lea.sflag [#allocation4], %s548
        %s550 = sand.u32 %s116, 1
        %s551 = smul.addr %s550, 16
        %s552 = scalar_lea.vmem [#allocation3], %s551
        // Predicated region
        $region37: #{tpu_custom_call.1} parent=35 // pred_check
          %p553 = pneg %p126
        $region38: #{tpu_custom_call.1} parent=35 // pred_check_branch
          %555 = sbr.rel (%p553) target = $region40
        $region39: #{tpu_custom_call.1} parent=35 // pred_region
          %s557 = ssub.s32 256, 256
          %558 = vsyncadd %s549, %s557
          %s559 = smul.addr %s19, 2
          %s560 = smul.addr %s559, 128
          %s561 = scalar_lea.hbm %s4, %s560
          %s562 = sshll.u32 %s552, 4
          %s563 = int_to_ptr.vmem [resolvable:$true] %s562
          %568 = dma.vmem_to_hbm [thread:$0]  %s563, 256, %s561, %s549, 128, 128, 8
        $region40: #{tpu_custom_call.1} parent=35 // pred_fallthru
          _
      $region36: #{tpu_custom_call.1} parent=5 // pred_fallthru
        _
      %p569 = scmp.le.s32.totalorder 2, %s14
      // Predicated region
      $region41: #{tpu_custom_call.1} parent=5 // pred_check
        %p570 = pneg %p569
      $region42: #{tpu_custom_call.1} parent=5 // pred_check_branch
        %572 = sbr.rel (%p570) target = $region44
      $region43: #{tpu_custom_call.1} parent=5 // pred_region
        %s573 = ssub.s32 %s14, 2
        // Predicated region
        $region45: #{tpu_custom_call.1} parent=43 // pred_check
          %p574 = pneg %p132
        $region46: #{tpu_custom_call.1} parent=43 // pred_check_branch
          %576 = sbr.rel (%p574) target = $region48
        $region47: #{tpu_custom_call.1} parent=43 // pred_region
          %s577 = sand.u32 %s117, 1
          %s578 = scalar_lea.sflag [#allocation4], %s577
          %s579 = sand.u32 %s117, 1
          %s580 = smul.addr %s579, 16
          %s581 = scalar_lea.vmem [#allocation3], %s580
          %582 = dma.done %s578, 256
        $region48: #{tpu_custom_call.1} parent=43 // pred_fallthru
          _
      $region44: #{tpu_custom_call.1} parent=5 // pred_fallthru
        _
    $region6: #{tpu_custom_call.1} parent=1 // loop_footer
      %s18 = sadd.s32 1, %s14
    $region7: #{tpu_custom_call.1} parent=1 // loop_footer_branch
      %13 = sbr.rel target = $region3
    $region8: #{tpu_custom_call.1} parent=1 // loop_exit
      _
    %583 = vsyncpa [#allocation4], 1
    %s584 = scalar_lea.sflag [#allocation4], 1
    %585 = vsyncpa %s584, 1

</llo_original>
